<compile_context>
chip_gen: v5e
topology: v5e:2x2
jax: 0.10.0
libtpu: 0.0.40
codegen_flags: <defaults>
</compile_context>

<pallas_src>
import numpy as np
import jax
import jax.numpy as jnp
from jax import lax
from jax.experimental import pallas as pl
from jax.experimental.pallas import tpu as pltpu

# Model constants (from the PyTorch module)
CONV1_OUT = 50          # C1
CONV2_OUT = 50          # C2
KERNEL1 = 16            # K1
KERNEL2 = 8             # K2
TIMESTEPS = 1 * 24      # T
OUTLEN1 = TIMESTEPS - KERNEL1 + 1   # L1 = 9
OUTLEN2 = OUTLEN1 - KERNEL2 + 1     # L2 = 2
DROPOUT_P = 0.2         # inference: identity

L1C1 = OUTLEN1 * CONV1_OUT          # 450
L2C2 = OUTLEN2 * CONV2_OUT          # 100
T_AUG = TIMESTEPS + 1               # 25: extra ones column carries conv1 bias


def net_kernel(x_ref, w1_ref, w2_ref, b2_ref, wfc_ref, bfc_ref, o_ref):
    """One grid step == one tile of TILE_B batch elements (batch on lanes).

    x_ref  : (TILE_B, T+1)  bf16  natural-layout input slab, last column = 1
    w1_ref : (L1*C1, T+1)   bf16  conv1 folded Toeplitz-block + bias column
    w2_ref : (L2*C2, L1*C1) bf16  conv2 folded Toeplitz-block
    b2_ref : (L2*C2, 1)     f32
    wfc_ref: (1, L2*C2)     bf16  fc weight permuted to (t2, c2) flat order
    bfc_ref: (1, 1)         f32   SMEM scalar
    o_ref  : (1, TILE_B)    f32   lane-dense output row for this tile
    """
    # conv1 + bias (augmented column) + ReLU.  The input transpose is folded
    # into the dot: both operands contract on their last axis (q @ k.T form).
    h1 = lax.dot_general(
        w1_ref[...], x_ref[...],
        dimension_numbers=(((1,), (1,)), ((), ())),
        preferred_element_type=jnp.float32)                  # (L1*C1, TILE_B) f32
    h1 = jnp.maximum(h1, 0.0)
    # TODO(synk): nn.Dropout(p=0.2) is an identity at inference; training-mode
    # stochastic masking (pltpu.prng_*) is intentionally not implemented.

    # conv2 + bias + ReLU: single MXU matmul (K = L1*C1 = 450 contraction).
    h2 = jnp.dot(w2_ref[...], h1.astype(jnp.bfloat16),
                 preferred_element_type=jnp.float32)          # (L2*C2, TILE_B)
    h2 = jnp.maximum(h2 + b2_ref[...], 0.0)

    # fc: (1, 100) @ (100, TILE_B) -> lane-dense (1, TILE_B) row.
    out = jnp.dot(wfc_ref[...], h2.astype(jnp.bfloat16),
                  preferred_element_type=jnp.float32)
    o_ref[...] = out + bfc_ref[0, 0]


def _build_kernel_weights(w1_t, b1, w2_t, b2, wfc_t, bfc):
    """Fold PyTorch conv/fc weights into dense matrices (glue, runs once)."""
    # conv1 -> W1[t*C1 + c1, j] = w1[c1, 0, j - t]  for 0 <= j - t < K1, else 0
    w1 = w1_t[:, 0, :].astype(jnp.float32)                          # (C1, K1)
    t1 = jnp.arange(OUTLEN1)
    j = jnp.arange(TIMESTEPS)
    k1 = j[None, :] - t1[:, None]                                   # (L1, T)
    v1 = (k1 >= 0) & (k1 < KERNEL1)
    g1 = jnp.take(w1, jnp.clip(k1, 0, KERNEL1 - 1), axis=1)         # (C1, L1, T)
    w1_big = jnp.where(v1[None, :, :], g1, 0.0)
    w1_big = jnp.transpose(w1_big, (1, 0, 2)).reshape(L1C1, TIMESTEPS)
    b1_col = jnp.tile(b1.astype(jnp.float32), OUTLEN1).reshape(L1C1, 1)
    # Fold conv1 bias in as an augmented last column (input carries a ones col).
    w1_aug = jnp.concatenate([w1_big, b1_col], axis=1).astype(jnp.bfloat16)

    # conv2 -> W2[t2*C2 + c2, t1*C1 + c1] = w2[c2, c1, t1 - t2] (masked)
    t2 = jnp.arange(OUTLEN2)
    k2 = t1[None, :] - t2[:, None]                                  # (L2, L1)
    v2 = (k2 >= 0) & (k2 < KERNEL2)
    g2 = jnp.take(w2_t.astype(jnp.float32),
                  jnp.clip(k2, 0, KERNEL2 - 1).reshape(-1), axis=2)
    g2 = g2.reshape(CONV2_OUT, CONV1_OUT, OUTLEN2, OUTLEN1)         # (C2, C1, L2, L1)
    g2 = jnp.where(v2[None, None, :, :], g2, 0.0)
    w2_big = jnp.transpose(g2, (2, 0, 3, 1)).reshape(L2C2, L1C1).astype(jnp.bfloat16)
    b2_col = jnp.tile(b2.astype(jnp.float32), OUTLEN2).reshape(L2C2, 1)

    # fc: PyTorch flattens (C2, L2) row-major (index c2*L2 + t2); our h2 rows
    # are ordered t2*C2 + c2, so permute the Linear weight accordingly.
    wfc_row = (wfc_t.astype(jnp.float32)
               .reshape(CONV2_OUT, OUTLEN2).T.reshape(1, L2C2).astype(jnp.bfloat16))
    bfc_k = bfc.astype(jnp.float32).reshape(1, 1)
    return w1_aug, w2_big, b2_col, wfc_row, bfc_k


def _round_up(n, m):
    return ((n + m - 1) // m) * m


def net_forward(x, w1_t, b1, w2_t, b2, wfc_t, bfc, *, tile_b=512):
    """x: (B, 1, T) float32 (PyTorch NCL layout). Returns (B,) float32."""
    B = x.shape[0]
    # Lane-dense batch tile: multiple of 128, capped so small batches don't
    # over-pad; large batches keep >= 2 grid steps for v7x's two TensorCores.
    tile_b = int(max(128, min(tile_b, _round_up(B, 128))))
    num_tiles = pl.cdiv(B, tile_b)
    B_pad = num_tiles * tile_b

    # Natural (B, T) layout (no transpose): append the bias ones column, pad
    # the batch to a tile multiple, and cast to bf16 in one fused wrapper pass.
    x2 = x[:, 0, :].astype(jnp.float32)                             # (B, T)
    x_aug = jnp.concatenate([x2, jnp.ones((B, 1), jnp.float32)], axis=1)
    x_aug = jnp.pad(x_aug, ((0, B_pad - B), (0, 0))).astype(jnp.bfloat16)

    w1_aug, w2_big, b2_col, wfc_row, bfc_k = _build_kernel_weights(
        w1_t, b1, w2_t, b2, wfc_t, bfc)

    out = pl.pallas_call(
        net_kernel,
        out_shape=jax.ShapeDtypeStruct((1, B_pad), jnp.float32),
        grid=(num_tiles,),
        in_specs=[
            pl.BlockSpec((tile_b, T_AUG), lambda b: (b, 0)),        # per-tile input
            pl.BlockSpec((L1C1, T_AUG), lambda b: (0, 0)),          # resident weights
            pl.BlockSpec((L2C2, L1C1), lambda b: (0, 0)),
            pl.BlockSpec((L2C2, 1), lambda b: (0, 0)),
            pl.BlockSpec((1, L2C2), lambda b: (0, 0)),
            pl.BlockSpec(memory_space=pltpu.MemorySpace.SMEM),      # fc bias scalar
        ],
        out_specs=pl.BlockSpec((1, tile_b), lambda b: (0, b)),
        compiler_params=pltpu.CompilerParams(
            dimension_semantics=("parallel",)),                     # megacore on v7x
    )(x_aug, w1_aug, w2_big, b2_col, wfc_row, bfc_k)
    return out[0, :B]


def net_reference(x, w1_t, b1, w2_t, b2, wfc_t, bfc):
    """Pure-JAX reference matching the PyTorch forward (eval mode)."""
    dn = ('NCH', 'OIH', 'NCH')
    h = lax.conv_general_dilated(x, w1_t, (1,), 'VALID', dimension_numbers=dn)
    h = jax.nn.relu(h + b1[None, :, None])
    h2 = lax.conv_general_dilated(h, w2_t, (1,), 'VALID', dimension_numbers=dn)
    h2 = jax.nn.relu(h2 + b2[None, :, None])
    flat = h2.reshape(x.shape[0], -1)                       # (B, C2*L2) row-major
    return (flat @ wfc_t.T + bfc)[:, 0]


if __name__ == "__main__":
    B = 4
    key = jax.random.PRNGKey(0)
    kx, k1, k2, k3, k4, k5, k6 = jax.random.split(key, 7)

    # Deterministic synthetic parameters in PyTorch layouts.
    x = jax.random.normal(kx, (B, 1, TIMESTEPS), jnp.float32)
    w1_t = jax.random.normal(k1, (CONV1_OUT, 1, KERNEL1), jnp.float32) * 0.1
    b1 = jax.random.normal(k2, (CONV1_OUT,), jnp.float32) * 0.1
    w2_t = jax.random.normal(k3, (CONV2_OUT, CONV1_OUT, KERNEL2), jnp.float32) * 0.05
    b2 = jax.random.normal(k4, (CONV2_OUT,), jnp.float32) * 0.1
    wfc_t = jax.random.normal(k5, (1, OUTLEN2 * CONV2_OUT), jnp.float32) * 0.1
    bfc = jax.random.normal(k6, (1,), jnp.float32) * 0.1

    out = net_forward(x, w1_t, b1, w2_t, b2, wfc_t, bfc)
    out = jax.block_until_ready(out)

    ref = net_reference(x, w1_t, b1, w2_t, b2, wfc_t, bfc)
    # bf16 MXU operands with f32 accumulation -> relaxed tolerance.
    np.testing.assert_allclose(np.asarray(out), np.asarray(ref),
                               rtol=2e-2, atol=2e-2)
    print("KERNEL_OK")
</pallas_src>

<mosaic_0001>
module attributes {stable_mosaic.version = 11 : i64} {
  func.func @net_kernel(%arg0: i32, %arg1: memref<128x25xbf16, #tpu.memory_space<vmem>>, %arg2: memref<450x25xbf16, #tpu.memory_space<vmem>>, %arg3: memref<100x450xbf16, #tpu.memory_space<vmem>>, %arg4: memref<100x1xf32, #tpu.memory_space<vmem>>, %arg5: memref<1x100xbf16, #tpu.memory_space<vmem>>, %arg6: memref<1x1xf32, #tpu.memory_space<smem>>, %arg7: memref<1x128xf32, #tpu.memory_space<vmem>>) attributes {dimension_semantics = [#tpu.dimension_semantics<parallel>], iteration_bounds = array<i64: 1>, scalar_prefetch = 0 : i64, scratch_operands = 0 : i64, tpu.core_type = #tpu.core_type<tc>, window_params = [{transform_indices = @transform_0, window_bounds = array<i64: 128, 25>}, {pipeline_mode = #tpu.pipeline_mode<synchronous>, transform_indices = @transform_1, window_bounds = array<i64: 450, 25>}, {pipeline_mode = #tpu.pipeline_mode<synchronous>, transform_indices = @transform_2, window_bounds = array<i64: 100, 450>}, {pipeline_mode = #tpu.pipeline_mode<synchronous>, transform_indices = @transform_3, window_bounds = array<i64: 100, 1>}, {pipeline_mode = #tpu.pipeline_mode<synchronous>, transform_indices = @transform_4, window_bounds = array<i64: 1, 100>}, {transform_indices = @transform_5, window_bounds = array<i64: 1, 1>}, {transform_indices = @transform_6, window_bounds = array<i64: 1, 128>}]} {
    %c0 = arith.constant 0 : index
    %c0_0 = arith.constant 0 : index
    %0 = vector.load %arg2[%c0, %c0_0] : memref<450x25xbf16, #tpu.memory_space<vmem>>, vector<450x25xbf16>
    %c0_1 = arith.constant 0 : index
    %c0_2 = arith.constant 0 : index
    %1 = vector.load %arg1[%c0_1, %c0_2] : memref<128x25xbf16, #tpu.memory_space<vmem>>, vector<128x25xbf16>
    %cst = arith.constant dense<0.000000e+00> : vector<450x128xf32>
    %2 = tpu.matmul %0, %1, %cst {dimension_numbers = #tpu.dot_dimension_numbers<[1], [1], [0], [0], [0, 0, 1, 0], [], []>} : vector<450x25xbf16>, vector<128x25xbf16>, vector<450x128xf32> -> vector<450x128xf32>
    %cst_3 = arith.constant 0.000000e+00 : f32
    %3 = vector.broadcast %cst_3 : f32 to vector<450x128xf32>
    %4 = arith.maximumf %2, %3 : vector<450x128xf32>
    %c0_4 = arith.constant 0 : index
    %c0_5 = arith.constant 0 : index
    %5 = vector.load %arg3[%c0_4, %c0_5] : memref<100x450xbf16, #tpu.memory_space<vmem>>, vector<100x450xbf16>
    %6 = arith.truncf %4 : vector<450x128xf32> to vector<450x128xbf16>
    %cst_6 = arith.constant dense<0.000000e+00> : vector<100x128xf32>
    %7 = tpu.matmul %5, %6, %cst_6 {dimension_numbers = #tpu.dot_dimension_numbers<[1], [0], [0], [1], [0, 0, 1, 1], [], []>} : vector<100x450xbf16>, vector<450x128xbf16>, vector<100x128xf32> -> vector<100x128xf32>
    %c0_7 = arith.constant 0 : index
    %c0_8 = arith.constant 0 : index
    %8 = vector.load %arg4[%c0_7, %c0_8] : memref<100x1xf32, #tpu.memory_space<vmem>>, vector<100x1xf32>
    %9 = vector.broadcast %8 : vector<100x1xf32> to vector<100x128xf32>
    %10 = arith.addf %7, %9 : vector<100x128xf32>
    %cst_9 = arith.constant 0.000000e+00 : f32
    %11 = vector.broadcast %cst_9 : f32 to vector<100x128xf32>
    %12 = arith.maximumf %10, %11 : vector<100x128xf32>
    %c0_10 = arith.constant 0 : index
    %c0_11 = arith.constant 0 : index
    %13 = vector.load %arg5[%c0_10, %c0_11] : memref<1x100xbf16, #tpu.memory_space<vmem>>, vector<1x100xbf16>
    %14 = arith.truncf %12 : vector<100x128xf32> to vector<100x128xbf16>
    %cst_12 = arith.constant dense<0.000000e+00> : vector<1x128xf32>
    %15 = tpu.matmul %13, %14, %cst_12 {dimension_numbers = #tpu.dot_dimension_numbers<[1], [0], [0], [1], [0, 0, 1, 1], [], []>} : vector<1x100xbf16>, vector<100x128xbf16>, vector<1x128xf32> -> vector<1x128xf32>
    %c0_13 = arith.constant 0 : index
    %c0_14 = arith.constant 0 : index
    %16 = memref.load %arg6[%c0_13, %c0_14] : memref<1x1xf32, #tpu.memory_space<smem>>
    %17 = vector.broadcast %16 : f32 to vector<1x128xf32>
    %18 = arith.addf %15, %17 : vector<1x128xf32>
    %c0_15 = arith.constant 0 : index
    %c0_16 = arith.constant 0 : index
    %19 = vector.load %arg7[%c0_15, %c0_16] : memref<1x128xf32, #tpu.memory_space<vmem>>, vector<1x128xf32>
    tpu.vector_store %arg7[%c0_15, %c0_16], %18 {strides = array<i32>} : memref<1x128xf32, #tpu.memory_space<vmem>>, vector<1x128xf32>,
    return
  }
  func.func @transform_0(%arg0: i32) -> (i32, i32) {
    %c0_i32 = arith.constant 0 : i32
    %c0_i32_0 = arith.constant 0 : i32
    return %arg0, %c0_i32 : i32, i32
  }
  func.func @transform_1(%arg0: i32) -> (i32, i32) {
    %c0_i32 = arith.constant 0 : i32
    %c0_i32_0 = arith.constant 0 : i32
    %c0_i32_1 = arith.constant 0 : i32
    return %c0_i32, %c0_i32_0 : i32, i32
  }
  func.func @transform_2(%arg0: i32) -> (i32, i32) {
    %c0_i32 = arith.constant 0 : i32
    %c0_i32_0 = arith.constant 0 : i32
    %c0_i32_1 = arith.constant 0 : i32
    return %c0_i32, %c0_i32_0 : i32, i32
  }
  func.func @transform_3(%arg0: i32) -> (i32, i32) {
    %c0_i32 = arith.constant 0 : i32
    %c0_i32_0 = arith.constant 0 : i32
    %c0_i32_1 = arith.constant 0 : i32
    return %c0_i32, %c0_i32_0 : i32, i32
  }
  func.func @transform_4(%arg0: i32) -> (i32, i32) {
    %c0_i32 = arith.constant 0 : i32
    %c0_i32_0 = arith.constant 0 : i32
    %c0_i32_1 = arith.constant 0 : i32
    return %c0_i32, %c0_i32_0 : i32, i32
  }
  func.func @transform_5(%arg0: i32) -> (i32, i32) {
    %c0_i32 = arith.constant 0 : i32
    %c0_i32_0 = arith.constant 0 : i32
    %c0_i32_1 = arith.constant 0 : i32
    return %c0_i32, %c0_i32_0 : i32, i32
  }
  func.func @transform_6(%arg0: i32) -> (i32, i32) {
    %c0_i32 = arith.constant 0 : i32
    %c0_i32_0 = arith.constant 0 : i32
    return %c0_i32, %arg0 : i32, i32
  }
}

</mosaic_0001>

<llo_original>
// kernel: tpu_custom_call.1
$region0: #{tpu_custom_call.1}
  #allocation0 [shape = 'u32[]', space=smem, size = 0x4, offset = 0x4, fixed_abs, tag = 'smem constant byte address 0x4 - core index']
  #allocation1 [shape = 'u32[72,128]{1,0:T(1,128)}', space=vmem, size = 0x9000, scoped, tag = 'internal scratch']
  #allocation2 [shape = 'f32[1,1]{1,0:T(1,128)S(6)}', space=smem, size = 0x200, scoped, tag = 'scoped memory for tpu_custom_call.1']
  %s0 = inlined_call_operand.vmem [shape: bf16[128,25], index: 0, kind: input, shape index: {}]
  %s1 = inlined_call_operand.vmem [shape: bf16[450,25], index: 1, kind: input, shape index: {}]
  %s2 = inlined_call_operand.vmem [shape: bf16[100,450], index: 2, kind: input, shape index: {}]
  %s3 = inlined_call_operand.vmem [shape: f32[100,1], index: 3, kind: input, shape index: {}]
  %s4 = inlined_call_operand.vmem [shape: bf16[1,100], index: 4, kind: input, shape index: {}]
  %s5 = inlined_call_operand.<no memory space> [shape: f32[1,1], index: 5, kind: input, shape index: {}]
  %s6 = inlined_call_operand.hbm [shape: f32[1,128], index: 6, kind: output, shape index: {}]
  %s7 = sld [smem:[#allocation0]]
  $region34: #{tpu_custom_call.1} parent=0
    _
  %s9 = ssub.s32 1, %s7
  %s10 = scalar_select 0, %s9, %s7
  %11 = sst [smem:[#allocation2]] %s5
  $region1: #{tpu_custom_call.1} parent=0
    #allocation3 [shape = 'u8[512]{0}', space=vmem, size = 0x400, scoped, tag = 'output window, operand 0, single buffered']
    #allocation4 [shape = 's32[1]{0}', space=sflag, size = 0x4, scoped, tag = 'scoped memory for tpu_custom_call.1']
    %12 = vsyncpa [#allocation4], 0
    // Predicated region
    $region2: #{tpu_custom_call.1} parent=1 // pred_check
      _
    $region3: #{tpu_custom_call.1} parent=1 // pred_check_branch
      %14 = sbr.rel (0) target = $region5
    $region4: #{tpu_custom_call.1} parent=1 // pred_region
      _
    $region5: #{tpu_custom_call.1} parent=1 // pred_fallthru
      _
    // Predicated region
    $region6: #{tpu_custom_call.1} parent=1 // pred_check
      _
    $region7: #{tpu_custom_call.1} parent=1 // pred_check_branch
      %16 = sbr.rel (0) target = $region9
    $region8: #{tpu_custom_call.1} parent=1 // pred_region
      _
    $region9: #{tpu_custom_call.1} parent=1 // pred_fallthru
      _
    // Predicated region
    $region10: #{tpu_custom_call.1} parent=1 // pred_check
      _
    $region11: #{tpu_custom_call.1} parent=1 // pred_check_branch
      %18 = sbr.rel (0) target = $region13
    $region12: #{tpu_custom_call.1} parent=1 // pred_region
      _
    $region13: #{tpu_custom_call.1} parent=1 // pred_fallthru
      _
    // Predicated region
    $region14: #{tpu_custom_call.1} parent=1 // pred_check
      _
    $region15: #{tpu_custom_call.1} parent=1 // pred_check_branch
      %20 = sbr.rel (0) target = $region17
    $region16: #{tpu_custom_call.1} parent=1 // pred_region
      _
    $region17: #{tpu_custom_call.1} parent=1 // pred_fallthru
      _
    // Predicated region
    $region18: #{tpu_custom_call.1} parent=1 // pred_check
      _
    $region19: #{tpu_custom_call.1} parent=1 // pred_check_branch
      %22 = sbr.rel (0) target = $region21
    $region20: #{tpu_custom_call.1} parent=1 // pred_region
      _
    $region21: #{tpu_custom_call.1} parent=1 // pred_fallthru
      _
    // Predicated region
    $region22: #{tpu_custom_call.1} parent=1 // pred_check
      _
    $region23: #{tpu_custom_call.1} parent=1 // pred_check_branch
      %24 = sbr.rel (0) target = $region25
    $region24: #{tpu_custom_call.1} parent=1 // pred_region
      _
    $region25: #{tpu_custom_call.1} parent=1 // pred_fallthru
      _
    %v26 = vld [vmem:[%s1] sm:$0xf]
    %v27 = vld [vmem:[%s1 + $0x4] sm:$0xf]
    %v28 = vld [vmem:[%s1 + $0x8] sm:$0xf]
    %v29 = vld [vmem:[%s1 + $0xc] sm:$0xf]
    %v30 = vld [vmem:[%s1 + $0x10] sm:$0xf]
    %v31 = vld [vmem:[%s1 + $0x14] sm:$0xf]
    %v32 = vld [vmem:[%s1 + $0x18] sm:$0xf]
    %v33 = vld [vmem:[%s1 + $0x1c] sm:$0xf]
    %v34 = vld [vmem:[%s1 + $0x20] sm:$0xf]
    %v35 = vld [vmem:[%s1 + $0x24] sm:$0xf]
    %v36 = vld [vmem:[%s1 + $0x28] sm:$0xf]
    %v37 = vld [vmem:[%s1 + $0x2c] sm:$0xf]
    %v38 = vld [vmem:[%s1 + $0x30] sm:$0xf]
    %v39 = vld [vmem:[%s1 + $0x34] sm:$0xf]
    %v40 = vld [vmem:[%s1 + $0x38] sm:$0xf]
    %v41 = vld [vmem:[%s1 + $0x3c] sm:$0xf]
    %v42 = vld [vmem:[%s1 + $0x40] sm:$0xf]
    %v43 = vld [vmem:[%s1 + $0x44] sm:$0xf]
    %v44 = vld [vmem:[%s1 + $0x48] sm:$0xf]
    %v45 = vld [vmem:[%s1 + $0x4c] sm:$0xf]
    %v46 = vld [vmem:[%s1 + $0x50] sm:$0xf]
    %v47 = vld [vmem:[%s1 + $0x54] sm:$0xf]
    %v48 = vld [vmem:[%s1 + $0x58] sm:$0xf]
    %v49 = vld [vmem:[%s1 + $0x5c] sm:$0xf]
    %v50 = vld [vmem:[%s1 + $0x60] sm:$0xf]
    %v51 = vld [vmem:[%s1 + $0x64] sm:$0xf]
    %v52 = vld [vmem:[%s1 + $0x68] sm:$0xf]
    %v53 = vld [vmem:[%s1 + $0x6c] sm:$0xf]
    %v54 = vld [vmem:[%s1 + $0x70] sm:$0xf]
    %v55 = vld [vmem:[%s1 + $0x74] sm:$0xf]
    %v56 = vld [vmem:[%s1 + $0x78] sm:$0xf]
    %v57 = vld [vmem:[%s1 + $0x7c] sm:$0xf]
    %v58 = vld [vmem:[%s1 + $0x80] sm:$0xf]
    %v59 = vld [vmem:[%s1 + $0x84] sm:$0xf]
    %v60 = vld [vmem:[%s1 + $0x88] sm:$0xf]
    %v61 = vld [vmem:[%s1 + $0x8c] sm:$0xf]
    %v62 = vld [vmem:[%s1 + $0x90] sm:$0xf]
    %v63 = vld [vmem:[%s1 + $0x94] sm:$0xf]
    %v64 = vld [vmem:[%s1 + $0x98] sm:$0xf]
    %v65 = vld [vmem:[%s1 + $0x9c] sm:$0xf]
    %v66 = vld [vmem:[%s1 + $0xa0] sm:$0xf]
    %v67 = vld [vmem:[%s1 + $0xa4] sm:$0xf]
    %v68 = vld [vmem:[%s1 + $0xa8] sm:$0xf]
    %v69 = vld [vmem:[%s1 + $0xac] sm:$0xf]
    %v70 = vld [vmem:[%s1 + $0xb0] sm:$0xf]
    %v71 = vld [vmem:[%s1 + $0xb4] sm:$0xf]
    %v72 = vld [vmem:[%s1 + $0xb8] sm:$0xf]
    %v73 = vld [vmem:[%s1 + $0xbc] sm:$0xf]
    %v74 = vld [vmem:[%s1 + $0xc0] sm:$0xf]
    %v75 = vld [vmem:[%s1 + $0xc4] sm:$0xf]
    %v76 = vld [vmem:[%s1 + $0xc8] sm:$0xf]
    %v77 = vld [vmem:[%s1 + $0xcc] sm:$0xf]
    %v78 = vld [vmem:[%s1 + $0xd0] sm:$0xf]
    %v79 = vld [vmem:[%s1 + $0xd4] sm:$0xf]
    %v80 = vld [vmem:[%s1 + $0xd8] sm:$0xf]
    %v81 = vld [vmem:[%s1 + $0xdc] sm:$0xf]
    %v82 = vld [vmem:[%s1 + $0xe0] sm:$0x1]
    %v83 = vld [vmem:[%s0] sm:$0xf]
    %v84 = vld [vmem:[%s0 + $0x4] sm:$0xf]
    %v85 = vld [vmem:[%s0 + $0x8] sm:$0xf]
    %v86 = vld [vmem:[%s0 + $0xc] sm:$0xf]
    %v87 = vld [vmem:[%s0 + $0x10] sm:$0xf]
    %v88 = vld [vmem:[%s0 + $0x14] sm:$0xf]
    %v89 = vld [vmem:[%s0 + $0x18] sm:$0xf]
    %v90 = vld [vmem:[%s0 + $0x1c] sm:$0xf]
    %v91 = vld [vmem:[%s0 + $0x20] sm:$0xf]
    %v92 = vld [vmem:[%s0 + $0x24] sm:$0xf]
    %v93 = vld [vmem:[%s0 + $0x28] sm:$0xf]
    %v94 = vld [vmem:[%s0 + $0x2c] sm:$0xf]
    %v95 = vld [vmem:[%s0 + $0x30] sm:$0xf]
    %v96 = vld [vmem:[%s0 + $0x34] sm:$0xf]
    %v97 = vld [vmem:[%s0 + $0x38] sm:$0xf]
    %v98 = vld [vmem:[%s0 + $0x3c] sm:$0xf]
    %v156 = vunpack.c.l.b16 %v26
    %v157 = vunpack.c.l.b16 %v27
    %v158 = vunpack.c.l.b16 %v28
    %v159 = vunpack.c.l.b16 %v29
    %v160 = vunpack.c.l.b16 %v30
    %v161 = vunpack.c.l.b16 %v31
    %v162 = vunpack.c.l.b16 %v32
    %v163 = vunpack.c.l.b16 %v33
    %v164 = vunpack.c.l.b16 %v34
    %v165 = vunpack.c.l.b16 %v35
    %v166 = vunpack.c.l.b16 %v36
    %v167 = vunpack.c.l.b16 %v37
    %v168 = vunpack.c.l.b16 %v38
    %v169 = vunpack.c.l.b16 %v39
    %v170 = vunpack.c.l.b16 %v40
    %v171 = vunpack.c.l.b16 %v41
    %v172 = vunpack.c.l.b16 %v42
    %v173 = vunpack.c.l.b16 %v43
    %v174 = vunpack.c.l.b16 %v44
    %v175 = vunpack.c.l.b16 %v45
    %v176 = vunpack.c.l.b16 %v46
    %v177 = vunpack.c.l.b16 %v47
    %v178 = vunpack.c.l.b16 %v48
    %v179 = vunpack.c.l.b16 %v49
    %v180 = vunpack.c.l.b16 %v50
    %v181 = vunpack.c.l.b16 %v51
    %v182 = vunpack.c.l.b16 %v52
    %v183 = vunpack.c.l.b16 %v53
    %v184 = vunpack.c.l.b16 %v54
    %v185 = vunpack.c.l.b16 %v55
    %v186 = vunpack.c.l.b16 %v56
    %v187 = vunpack.c.l.b16 %v57
    %v188 = vunpack.c.l.b16 %v58
    %v189 = vunpack.c.l.b16 %v59
    %v190 = vunpack.c.l.b16 %v60
    %v191 = vunpack.c.l.b16 %v61
    %v192 = vunpack.c.l.b16 %v62
    %v193 = vunpack.c.l.b16 %v63
    %v194 = vunpack.c.l.b16 %v64
    %v195 = vunpack.c.l.b16 %v65
    %v196 = vunpack.c.l.b16 %v66
    %v197 = vunpack.c.l.b16 %v67
    %v198 = vunpack.c.l.b16 %v68
    %v199 = vunpack.c.l.b16 %v69
    %v200 = vunpack.c.l.b16 %v70
    %v201 = vunpack.c.l.b16 %v71
    %v202 = vunpack.c.l.b16 %v72
    %v203 = vunpack.c.l.b16 %v73
    %v204 = vunpack.c.l.b16 %v74
    %v205 = vunpack.c.l.b16 %v75
    %v206 = vunpack.c.l.b16 %v76
    %v207 = vunpack.c.l.b16 %v77
    %v208 = vunpack.c.l.b16 %v78
    %v209 = vunpack.c.l.b16 %v79
    %v210 = vunpack.c.l.b16 %v80
    %v211 = vunpack.c.l.b16 %v81
    %v212 = vunpack.c.l.b16 %v82
    %v213 = vpack.c.b16 %v157, %v156
    %v214 = vpack.c.b16 %v159, %v158
    %v215 = vpack.c.b16 %v161, %v160
    %v216 = vpack.c.b16 %v163, %v162
    %v217 = vpack.c.b16 %v165, %v164
    %v218 = vpack.c.b16 %v167, %v166
    %v219 = vpack.c.b16 %v169, %v168
    %v220 = vpack.c.b16 %v171, %v170
    %v221 = vpack.c.b16 %v173, %v172
    %v222 = vpack.c.b16 %v175, %v174
    %v223 = vpack.c.b16 %v177, %v176
    %v224 = vpack.c.b16 %v179, %v178
    %v225 = vpack.c.b16 %v181, %v180
    %v226 = vpack.c.b16 %v183, %v182
    %v227 = vpack.c.b16 %v185, %v184
    %v228 = vpack.c.b16 %v187, %v186
    %v229 = vpack.c.b16 %v189, %v188
    %v230 = vpack.c.b16 %v191, %v190
    %v231 = vpack.c.b16 %v193, %v192
    %v232 = vpack.c.b16 %v195, %v194
    %v233 = vpack.c.b16 %v197, %v196
    %v234 = vpack.c.b16 %v199, %v198
    %v235 = vpack.c.b16 %v201, %v200
    %v236 = vpack.c.b16 %v203, %v202
    %v237 = vpack.c.b16 %v205, %v204
    %v238 = vpack.c.b16 %v207, %v206
    %v239 = vpack.c.b16 %v209, %v208
    %v240 = vpack.c.b16 %v211, %v210
    %v241 = vpack.c.b16 %v212, %v212
    %v258 = vunpack.c.l.b16 %v83
    %v259 = vunpack.c.l.b16 %v84
    %v260 = vunpack.c.l.b16 %v85
    %v261 = vunpack.c.l.b16 %v86
    %v262 = vunpack.c.l.b16 %v87
    %v263 = vunpack.c.l.b16 %v88
    %v264 = vunpack.c.l.b16 %v89
    %v265 = vunpack.c.l.b16 %v90
    %v266 = vunpack.c.l.b16 %v91
    %v267 = vunpack.c.l.b16 %v92
    %v268 = vunpack.c.l.b16 %v93
    %v269 = vunpack.c.l.b16 %v94
    %v270 = vunpack.c.l.b16 %v95
    %v271 = vunpack.c.l.b16 %v96
    %v272 = vunpack.c.l.b16 %v97
    %v273 = vunpack.c.l.b16 %v98
    %v274 = vpack.c.b16 %v259, %v258
    %v275 = vpack.c.b16 %v261, %v260
    %v276 = vpack.c.b16 %v263, %v262
    %v277 = vpack.c.b16 %v265, %v264
    %v278 = vpack.c.b16 %v267, %v266
    %v279 = vpack.c.b16 %v269, %v268
    %v280 = vpack.c.b16 %v271, %v270
    %v281 = vpack.c.b16 %v273, %v272
    %vm282 = vcmask 203776
    %v284 = vsel %vm282, %v213, 0
    %v287 = vsel %vm282, %v214, 0
    %v290 = vsel %vm282, %v215, 0
    %v293 = vsel %vm282, %v216, 0
    %v296 = vsel %vm282, %v217, 0
    %v299 = vsel %vm282, %v218, 0
    %v302 = vsel %vm282, %v219, 0
    %v305 = vsel %vm282, %v220, 0
    %v308 = vsel %vm282, %v221, 0
    %v311 = vsel %vm282, %v222, 0
    %v314 = vsel %vm282, %v223, 0
    %v317 = vsel %vm282, %v224, 0
    %v320 = vsel %vm282, %v225, 0
    %v323 = vsel %vm282, %v226, 0
    %v326 = vsel %vm282, %v227, 0
    %v329 = vsel %vm282, %v228, 0
    %v332 = vsel %vm282, %v229, 0
    %v335 = vsel %vm282, %v230, 0
    %v338 = vsel %vm282, %v231, 0
    %v341 = vsel %vm282, %v232, 0
    %v344 = vsel %vm282, %v233, 0
    %v347 = vsel %vm282, %v234, 0
    %v350 = vsel %vm282, %v235, 0
    %v353 = vsel %vm282, %v236, 0
    %v356 = vsel %vm282, %v237, 0
    %v359 = vsel %vm282, %v238, 0
    %v362 = vsel %vm282, %v239, 0
    %v365 = vsel %vm282, %v240, 0
    %v368 = vsel %vm282, %v241, 0
    %v371 = vsel %vm282, %v274, 0
    %v374 = vsel %vm282, %v275, 0
    %v377 = vsel %vm282, %v276, 0
    %v380 = vsel %vm282, %v277, 0
    %v383 = vsel %vm282, %v278, 0
    %v386 = vsel %vm282, %v279, 0
    %v389 = vsel %vm282, %v280, 0
    %v392 = vsel %vm282, %v281, 0
    %394 = vmatpush.bf16.xpose.msra.mxu0 %v392
    %395 = vmatpush.bf16.xpose.msra.mxu0 %v389
    %396 = vmatpush.bf16.xpose.msra.mxu0 %v386
    %397 = vmatpush.bf16.xpose.msra.mxu0 %v383
    %398 = vmatpush.bf16.xpose.msra.mxu0 %v380
    %399 = vmatpush.bf16.xpose.msra.mxu0 %v377
    %400 = vmatpush.bf16.xpose.msra.mxu0 %v374
    %401 = vmatpush.bf16.xpose.msra.mxu0 %v371
    %402 = vmatmul.bf16.gmra.mxu0 %v284
    %v403 = vpop.f32.mrf.mxu0
    %v404 = vadd.f32 0.0, %v403
    %v405 = vpop.f32.mrf.mxu0
    %v406 = vadd.f32 0.0, %v405
    %407 = vmatmul.bf16.gmra.mxu0 %v287
    %v408 = vpop.f32.mrf.mxu0
    %v409 = vadd.f32 0.0, %v408
    %v410 = vpop.f32.mrf.mxu0
    %v411 = vadd.f32 0.0, %v410
    %412 = vmatmul.bf16.gmra.mxu0 %v290
    %v413 = vpop.f32.mrf.mxu0
    %v414 = vadd.f32 0.0, %v413
    %v415 = vpop.f32.mrf.mxu0
    %v416 = vadd.f32 0.0, %v415
    %417 = vmatmul.bf16.gmra.mxu0 %v293
    %v418 = vpop.f32.mrf.mxu0
    %v419 = vadd.f32 0.0, %v418
    %v420 = vpop.f32.mrf.mxu0
    %v421 = vadd.f32 0.0, %v420
    %422 = vmatmul.bf16.gmra.mxu0 %v296
    %v423 = vpop.f32.mrf.mxu0
    %v424 = vadd.f32 0.0, %v423
    %v425 = vpop.f32.mrf.mxu0
    %v426 = vadd.f32 0.0, %v425
    %427 = vmatmul.bf16.gmra.mxu0 %v299
    %v428 = vpop.f32.mrf.mxu0
    %v429 = vadd.f32 0.0, %v428
    %v430 = vpop.f32.mrf.mxu0
    %v431 = vadd.f32 0.0, %v430
    %432 = vmatmul.bf16.gmra.mxu0 %v302
    %v433 = vpop.f32.mrf.mxu0
    %v434 = vadd.f32 0.0, %v433
    %v435 = vpop.f32.mrf.mxu0
    %v436 = vadd.f32 0.0, %v435
    %437 = vmatmul.bf16.gmra.mxu0 %v305
    %v438 = vpop.f32.mrf.mxu0
    %v439 = vadd.f32 0.0, %v438
    %v440 = vpop.f32.mrf.mxu0
    %v441 = vadd.f32 0.0, %v440
    %442 = vmatmul.bf16.gmra.mxu0 %v308
    %v443 = vpop.f32.mrf.mxu0
    %v444 = vadd.f32 0.0, %v443
    %v445 = vpop.f32.mrf.mxu0
    %v446 = vadd.f32 0.0, %v445
    %447 = vmatmul.bf16.gmra.mxu0 %v311
    %v448 = vpop.f32.mrf.mxu0
    %v449 = vadd.f32 0.0, %v448
    %v450 = vpop.f32.mrf.mxu0
    %v451 = vadd.f32 0.0, %v450
    %452 = vmatmul.bf16.gmra.mxu0 %v314
    %v453 = vpop.f32.mrf.mxu0
    %v454 = vadd.f32 0.0, %v453
    %v455 = vpop.f32.mrf.mxu0
    %v456 = vadd.f32 0.0, %v455
    %457 = vmatmul.bf16.gmra.mxu0 %v317
    %v458 = vpop.f32.mrf.mxu0
    %v459 = vadd.f32 0.0, %v458
    %v460 = vpop.f32.mrf.mxu0
    %v461 = vadd.f32 0.0, %v460
    %462 = vmatmul.bf16.gmra.mxu0 %v320
    %v463 = vpop.f32.mrf.mxu0
    %v464 = vadd.f32 0.0, %v463
    %v465 = vpop.f32.mrf.mxu0
    %v466 = vadd.f32 0.0, %v465
    %467 = vmatmul.bf16.gmra.mxu0 %v323
    %v468 = vpop.f32.mrf.mxu0
    %v469 = vadd.f32 0.0, %v468
    %v470 = vpop.f32.mrf.mxu0
    %v471 = vadd.f32 0.0, %v470
    %472 = vmatmul.bf16.gmra.mxu0 %v326
    %v473 = vpop.f32.mrf.mxu0
    %v474 = vadd.f32 0.0, %v473
    %v475 = vpop.f32.mrf.mxu0
    %v476 = vadd.f32 0.0, %v475
    %477 = vmatmul.bf16.gmra.mxu0 %v329
    %v478 = vpop.f32.mrf.mxu0
    %v479 = vadd.f32 0.0, %v478
    %v480 = vpop.f32.mrf.mxu0
    %v481 = vadd.f32 0.0, %v480
    %482 = vmatmul.bf16.gmra.mxu0 %v332
    %v483 = vpop.f32.mrf.mxu0
    %v484 = vadd.f32 0.0, %v483
    %v485 = vpop.f32.mrf.mxu0
    %v486 = vadd.f32 0.0, %v485
    %487 = vmatmul.bf16.gmra.mxu0 %v335
    %v488 = vpop.f32.mrf.mxu0
    %v489 = vadd.f32 0.0, %v488
    %v490 = vpop.f32.mrf.mxu0
    %v491 = vadd.f32 0.0, %v490
    %492 = vmatmul.bf16.gmra.mxu0 %v338
    %v493 = vpop.f32.mrf.mxu0
    %v494 = vadd.f32 0.0, %v493
    %v495 = vpop.f32.mrf.mxu0
    %v496 = vadd.f32 0.0, %v495
    %497 = vmatmul.bf16.gmra.mxu0 %v341
    %v498 = vpop.f32.mrf.mxu0
    %v499 = vadd.f32 0.0, %v498
    %v500 = vpop.f32.mrf.mxu0
    %v501 = vadd.f32 0.0, %v500
    %502 = vmatmul.bf16.gmra.mxu0 %v344
    %v503 = vpop.f32.mrf.mxu0
    %v504 = vadd.f32 0.0, %v503
    %v505 = vpop.f32.mrf.mxu0
    %v506 = vadd.f32 0.0, %v505
    %507 = vmatmul.bf16.gmra.mxu0 %v347
    %v508 = vpop.f32.mrf.mxu0
    %v509 = vadd.f32 0.0, %v508
    %v510 = vpop.f32.mrf.mxu0
    %v511 = vadd.f32 0.0, %v510
    %512 = vmatmul.bf16.gmra.mxu0 %v350
    %v513 = vpop.f32.mrf.mxu0
    %v514 = vadd.f32 0.0, %v513
    %v515 = vpop.f32.mrf.mxu0
    %v516 = vadd.f32 0.0, %v515
    %517 = vmatmul.bf16.gmra.mxu0 %v353
    %v518 = vpop.f32.mrf.mxu0
    %v519 = vadd.f32 0.0, %v518
    %v520 = vpop.f32.mrf.mxu0
    %v521 = vadd.f32 0.0, %v520
    %522 = vmatmul.bf16.gmra.mxu0 %v356
    %v523 = vpop.f32.mrf.mxu0
    %v524 = vadd.f32 0.0, %v523
    %v525 = vpop.f32.mrf.mxu0
    %v526 = vadd.f32 0.0, %v525
    %527 = vmatmul.bf16.gmra.mxu0 %v359
    %v528 = vpop.f32.mrf.mxu0
    %v529 = vadd.f32 0.0, %v528
    %v530 = vpop.f32.mrf.mxu0
    %v531 = vadd.f32 0.0, %v530
    %532 = vmatmul.bf16.gmra.mxu0 %v362
    %v533 = vpop.f32.mrf.mxu0
    %v534 = vadd.f32 0.0, %v533
    %v535 = vpop.f32.mrf.mxu0
    %v536 = vadd.f32 0.0, %v535
    %537 = vmatmul.bf16.gmra.mxu0 %v365
    %v538 = vpop.f32.mrf.mxu0
    %v539 = vadd.f32 0.0, %v538
    %v540 = vpop.f32.mrf.mxu0
    %v541 = vadd.f32 0.0, %v540
    %542 = vmatmul.bf16.gmra.mxu0 %v368
    %v543 = vpop.f32.mrf.mxu0
    %v544 = vadd.f32 0.0, %v543
    %v545 = vpop.f32.mrf.mxu0
    %546 = vdwg.mxu0
    %v547 = vmax.f32 %v404, 0.0
    %v548 = vmax.f32 %v406, 0.0
    %v549 = vmax.f32 %v409, 0.0
    %v550 = vmax.f32 %v411, 0.0
    %v551 = vmax.f32 %v414, 0.0
    %v552 = vmax.f32 %v416, 0.0
    %v553 = vmax.f32 %v419, 0.0
    %v554 = vmax.f32 %v421, 0.0
    %v555 = vmax.f32 %v424, 0.0
    %v556 = vmax.f32 %v426, 0.0
    %v557 = vmax.f32 %v429, 0.0
    %v558 = vmax.f32 %v431, 0.0
    %v559 = vmax.f32 %v434, 0.0
    %v560 = vmax.f32 %v436, 0.0
    %v561 = vmax.f32 %v439, 0.0
    %v562 = vmax.f32 %v441, 0.0
    %v563 = vmax.f32 %v444, 0.0
    %v564 = vmax.f32 %v446, 0.0
    %v565 = vmax.f32 %v449, 0.0
    %v566 = vmax.f32 %v451, 0.0
    %v567 = vmax.f32 %v454, 0.0
    %v568 = vmax.f32 %v456, 0.0
    %v569 = vmax.f32 %v459, 0.0
    %v570 = vmax.f32 %v461, 0.0
    %v571 = vmax.f32 %v464, 0.0
    %v572 = vmax.f32 %v466, 0.0
    %v573 = vmax.f32 %v469, 0.0
    %v574 = vmax.f32 %v471, 0.0
    %v575 = vmax.f32 %v474, 0.0
    %v576 = vmax.f32 %v476, 0.0
    %v577 = vmax.f32 %v479, 0.0
    %v578 = vmax.f32 %v481, 0.0
    %v579 = vmax.f32 %v484, 0.0
    %v580 = vmax.f32 %v486, 0.0
    %v581 = vmax.f32 %v489, 0.0
    %v582 = vmax.f32 %v491, 0.0
    %v583 = vmax.f32 %v494, 0.0
    %v584 = vmax.f32 %v496, 0.0
    %v585 = vmax.f32 %v499, 0.0
    %v586 = vmax.f32 %v501, 0.0
    %v587 = vmax.f32 %v504, 0.0
    %v588 = vmax.f32 %v506, 0.0
    %v589 = vmax.f32 %v509, 0.0
    %v590 = vmax.f32 %v511, 0.0
    %v591 = vmax.f32 %v514, 0.0
    %v592 = vmax.f32 %v516, 0.0
    %v593 = vmax.f32 %v519, 0.0
    %v594 = vmax.f32 %v521, 0.0
    %v595 = vmax.f32 %v524, 0.0
    %v596 = vmax.f32 %v526, 0.0
    %v597 = vmax.f32 %v529, 0.0
    %v598 = vmax.f32 %v531, 0.0
    %v599 = vmax.f32 %v534, 0.0
    %v600 = vmax.f32 %v536, 0.0
    %v601 = vmax.f32 %v539, 0.0
    %v602 = vmax.f32 %v541, 0.0
    %v603 = vmax.f32 %v544, 0.0
    %v604 = vld [vmem:[%s2] sm:$0xff]
    %v605 = vld [vmem:[%s2 + $0x8] sm:$0xff]
    %v606 = vld [vmem:[%s2 + $0x10] sm:$0xff]
    %v607 = vld [vmem:[%s2 + $0x18] sm:$0xff]
    %v608 = vld [vmem:[%s2 + $0x20] sm:$0xff]
    %v609 = vld [vmem:[%s2 + $0x28] sm:$0xff]
    %v610 = vld [vmem:[%s2 + $0x30] sm:$0xff]
    %v611 = vld [vmem:[%s2 + $0x38] sm:$0xff]
    %v612 = vld [vmem:[%s2 + $0x40] sm:$0xff]
    %v613 = vld [vmem:[%s2 + $0x48] sm:$0xff]
    %v614 = vld [vmem:[%s2 + $0x50] sm:$0xff]
    %v615 = vld [vmem:[%s2 + $0x58] sm:$0xff]
    %v616 = vld [vmem:[%s2 + $0x60] sm:$0xff]
    %v617 = vld [vmem:[%s2 + $0x68] sm:$0xff]
    %v618 = vld [vmem:[%s2 + $0x70] sm:$0xff]
    %v619 = vld [vmem:[%s2 + $0x78] sm:$0xff]
    %v620 = vld [vmem:[%s2 + $0x80] sm:$0xff]
    %v621 = vld [vmem:[%s2 + $0x88] sm:$0xff]
    %v622 = vld [vmem:[%s2 + $0x90] sm:$0xff]
    %v623 = vld [vmem:[%s2 + $0x98] sm:$0xff]
    %v624 = vld [vmem:[%s2 + $0xa0] sm:$0xff]
    %v625 = vld [vmem:[%s2 + $0xa8] sm:$0xff]
    %v626 = vld [vmem:[%s2 + $0xb0] sm:$0xff]
    %v627 = vld [vmem:[%s2 + $0xb8] sm:$0xff]
    %v628 = vld [vmem:[%s2 + $0xc0] sm:$0x33]
    %v629 = vld [vmem:[%s2 + $0xc8] sm:$0x33]
    %v630 = vpack.c.bf16 %v548, %v547
    %v631 = vpack.c.bf16 %v550, %v549
    %v632 = vpack.c.bf16 %v552, %v551
    %v633 = vpack.c.bf16 %v554, %v553
    %v634 = vpack.c.bf16 %v556, %v555
    %v635 = vpack.c.bf16 %v558, %v557
    %v636 = vpack.c.bf16 %v560, %v559
    %v637 = vpack.c.bf16 %v562, %v561
    %v638 = vpack.c.bf16 %v564, %v563
    %v639 = vpack.c.bf16 %v566, %v565
    %v640 = vpack.c.bf16 %v568, %v567
    %v641 = vpack.c.bf16 %v570, %v569
    %v642 = vpack.c.bf16 %v572, %v571
    %v643 = vpack.c.bf16 %v574, %v573
    %v644 = vpack.c.bf16 %v576, %v575
    %v645 = vpack.c.bf16 %v578, %v577
    %v646 = vpack.c.bf16 %v580, %v579
    %v647 = vpack.c.bf16 %v582, %v581
    %v648 = vpack.c.bf16 %v584, %v583
    %v649 = vpack.c.bf16 %v586, %v585
    %v650 = vpack.c.bf16 %v588, %v587
    %v651 = vpack.c.bf16 %v590, %v589
    %v652 = vpack.c.bf16 %v592, %v591
    %v653 = vpack.c.bf16 %v594, %v593
    %v654 = vpack.c.bf16 %v596, %v595
    %v655 = vpack.c.bf16 %v598, %v597
    %v656 = vpack.c.bf16 %v600, %v599
    %v657 = vpack.c.bf16 %v602, %v601
    %v658 = vpack.c.bf16 %v603, %v603
    %v659 = vld [vmem:[%s3] sm:$0xff]
    %v660 = vld [vmem:[%s3 + $0x8] sm:$0xff]
    %v661 = vld [vmem:[%s3 + $0x10] sm:$0xff]
    %v662 = vld [vmem:[%s3 + $0x18] sm:$0xff]
    %v663 = vld [vmem:[%s3 + $0x20] sm:$0xff]
    %v664 = vld [vmem:[%s3 + $0x28] sm:$0xff]
    %v665 = vld [vmem:[%s3 + $0x30] sm:$0xff]
    %v666 = vld [vmem:[%s3 + $0x38] sm:$0xff]
    %v667 = vld [vmem:[%s3 + $0x40] sm:$0xff]
    %v668 = vld [vmem:[%s3 + $0x48] sm:$0xff]
    %v669 = vld [vmem:[%s3 + $0x50] sm:$0xff]
    %v670 = vld [vmem:[%s3 + $0x58] sm:$0xff]
    %v671 = vld [vmem:[%s3 + $0x60] sm:$0xf]
    %673 = vset.pattern.permute.xlu0 0
    %674 = vperm.xlu0 %673, %v659
    %v675 = vpop.permute.xlu0 %674
    %678 = vset.pattern.permute.xlu0 0
    %679 = vperm.xlu0 %678, %v660
    %v680 = vpop.permute.xlu0 %679
    %683 = vset.pattern.permute.xlu0 0
    %684 = vperm.xlu0 %683, %v661
    %v685 = vpop.permute.xlu0 %684
    %688 = vset.pattern.permute.xlu0 0
    %689 = vperm.xlu0 %688, %v662
    %v690 = vpop.permute.xlu0 %689
    %693 = vset.pattern.permute.xlu0 0
    %694 = vperm.xlu0 %693, %v663
    %v695 = vpop.permute.xlu0 %694
    %698 = vset.pattern.permute.xlu0 0
    %699 = vperm.xlu0 %698, %v664
    %v700 = vpop.permute.xlu0 %699
    %703 = vset.pattern.permute.xlu0 0
    %704 = vperm.xlu0 %703, %v665
    %v705 = vpop.permute.xlu0 %704
    %708 = vset.pattern.permute.xlu0 0
    %709 = vperm.xlu0 %708, %v666
    %v710 = vpop.permute.xlu0 %709
    %713 = vset.pattern.permute.xlu0 0
    %714 = vperm.xlu0 %713, %v667
    %v715 = vpop.permute.xlu0 %714
    %718 = vset.pattern.permute.xlu0 0
    %719 = vperm.xlu0 %718, %v668
    %v720 = vpop.permute.xlu0 %719
    %723 = vset.pattern.permute.xlu0 0
    %724 = vperm.xlu0 %723, %v669
    %v725 = vpop.permute.xlu0 %724
    %728 = vset.pattern.permute.xlu0 0
    %729 = vperm.xlu0 %728, %v670
    %v730 = vpop.permute.xlu0 %729
    %733 = vset.pattern.permute.xlu0 0
    %734 = vperm.xlu0 %733, %v671
    %v735 = vpop.permute.xlu0 %734
    %v763 = vunpack.c.l.b16 %v604
    %v764 = vunpack.c.h.b16 %v604
    %v765 = vunpack.c.l.b16 %v605
    %v766 = vunpack.c.h.b16 %v605
    %v767 = vunpack.c.l.b16 %v606
    %v768 = vunpack.c.h.b16 %v606
    %v769 = vunpack.c.l.b16 %v607
    %v770 = vunpack.c.h.b16 %v607
    %v771 = vunpack.c.l.b16 %v608
    %v772 = vunpack.c.h.b16 %v608
    %v773 = vunpack.c.l.b16 %v609
    %v774 = vunpack.c.h.b16 %v609
    %v775 = vunpack.c.l.b16 %v610
    %v776 = vunpack.c.h.b16 %v610
    %v777 = vunpack.c.l.b16 %v611
    %v778 = vunpack.c.h.b16 %v611
    %v779 = vunpack.c.l.b16 %v612
    %v780 = vunpack.c.h.b16 %v612
    %v781 = vunpack.c.l.b16 %v613
    %v782 = vunpack.c.h.b16 %v613
    %v783 = vunpack.c.l.b16 %v614
    %v784 = vunpack.c.h.b16 %v614
    %v785 = vunpack.c.l.b16 %v615
    %v786 = vunpack.c.h.b16 %v615
    %v787 = vunpack.c.l.b16 %v616
    %v788 = vunpack.c.h.b16 %v616
    %v789 = vunpack.c.l.b16 %v617
    %v790 = vunpack.c.h.b16 %v617
    %v791 = vunpack.c.l.b16 %v618
    %v792 = vunpack.c.h.b16 %v618
    %v793 = vunpack.c.l.b16 %v619
    %v794 = vunpack.c.h.b16 %v619
    %v795 = vunpack.c.l.b16 %v620
    %v796 = vunpack.c.h.b16 %v620
    %v797 = vunpack.c.l.b16 %v621
    %v798 = vunpack.c.h.b16 %v621
    %v799 = vunpack.c.l.b16 %v622
    %v800 = vunpack.c.h.b16 %v622
    %v801 = vunpack.c.l.b16 %v623
    %v802 = vunpack.c.h.b16 %v623
    %v803 = vunpack.c.l.b16 %v624
    %v804 = vunpack.c.h.b16 %v624
    %v805 = vunpack.c.l.b16 %v625
    %v806 = vunpack.c.h.b16 %v625
    %v807 = vunpack.c.l.b16 %v626
    %v808 = vunpack.c.h.b16 %v626
    %v809 = vunpack.c.l.b16 %v627
    %v810 = vunpack.c.h.b16 %v627
    %v811 = vunpack.c.l.b16 %v628
    %v812 = vunpack.c.h.b16 %v628
    %v813 = vunpack.c.l.b16 %v629
    %v814 = vunpack.c.h.b16 %v629
    %v815 = vpack.c.b16 %v767, %v763
    %v816 = vpack.c.b16 %v768, %v764
    %v817 = vpack.c.b16 %v769, %v765
    %v818 = vpack.c.b16 %v770, %v766
    %v819 = vpack.c.b16 %v775, %v771
    %v820 = vpack.c.b16 %v776, %v772
    %v821 = vpack.c.b16 %v777, %v773
    %v822 = vpack.c.b16 %v778, %v774
    %v823 = vpack.c.b16 %v783, %v779
    %v824 = vpack.c.b16 %v784, %v780
    %v825 = vpack.c.b16 %v785, %v781
    %v826 = vpack.c.b16 %v786, %v782
    %v827 = vpack.c.b16 %v791, %v787
    %v828 = vpack.c.b16 %v792, %v788
    %v829 = vpack.c.b16 %v793, %v789
    %v830 = vpack.c.b16 %v794, %v790
    %v831 = vpack.c.b16 %v799, %v795
    %v832 = vpack.c.b16 %v800, %v796
    %v833 = vpack.c.b16 %v801, %v797
    %v834 = vpack.c.b16 %v802, %v798
    %v835 = vpack.c.b16 %v807, %v803
    %v836 = vpack.c.b16 %v808, %v804
    %v837 = vpack.c.b16 %v809, %v805
    %v838 = vpack.c.b16 %v810, %v806
    %v839 = vpack.c.b16 %v811, %v811
    %v840 = vpack.c.b16 %v812, %v812
    %v841 = vpack.c.b16 %v813, %v813
    %v842 = vpack.c.b16 %v814, %v814
    %vm864 = vcmask 539648
    %v866 = vsel %vm864, %v818, 0
    %v869 = vsel %vm864, %v822, 0
    %v872 = vsel %vm864, %v826, 0
    %v875 = vsel %vm864, %v830, 0
    %v878 = vsel %vm864, %v834, 0
    %v881 = vsel %vm864, %v838, 0
    %v884 = vsel %vm864, %v842, 0
    %vm886 = vcmask 1040384
    %v888 = vsel %vm886, %v658, 0
    %890 = vmatpush.bf16.msra.mxu0 %v637
    %891 = vmatpush.bf16.msra.mxu0 %v636
    %892 = vmatpush.bf16.msra.mxu0 %v635
    %893 = vmatpush.bf16.msra.mxu0 %v634
    %894 = vmatpush.bf16.msra.mxu0 %v633
    %895 = vmatpush.bf16.msra.mxu0 %v632
    %896 = vmatpush.bf16.msra.mxu0 %v631
    %897 = vmatpush.bf16.msra.mxu0 %v630
    %898 = vmatmul.bf16.gmra.mxu0 %v815
    %v899 = vpop.f32.mrf.mxu0
    %v900 = vadd.f32 %v675, %v899
    %v901 = vpop.f32.mrf.mxu0
    %v902 = vadd.f32 %v680, %v901
    %903 = vmatmul.bf16.gmra.mxu0 %v819
    %v904 = vpop.f32.mrf.mxu0
    %v905 = vadd.f32 %v685, %v904
    %v906 = vpop.f32.mrf.mxu0
    %v907 = vadd.f32 %v690, %v906
    %908 = vmatmul.bf16.gmra.mxu0 %v823
    %v909 = vpop.f32.mrf.mxu0
    %v910 = vadd.f32 %v695, %v909
    %v911 = vpop.f32.mrf.mxu0
    %v912 = vadd.f32 %v700, %v911
    %913 = vmatmul.bf16.gmra.mxu0 %v827
    %v914 = vpop.f32.mrf.mxu0
    %v915 = vadd.f32 %v705, %v914
    %v916 = vpop.f32.mrf.mxu0
    %v917 = vadd.f32 %v710, %v916
    %918 = vmatmul.bf16.gmra.mxu0 %v831
    %v919 = vpop.f32.mrf.mxu0
    %v920 = vadd.f32 %v715, %v919
    %v921 = vpop.f32.mrf.mxu0
    %v922 = vadd.f32 %v720, %v921
    %923 = vmatmul.bf16.gmra.mxu0 %v835
    %v924 = vpop.f32.mrf.mxu0
    %v925 = vadd.f32 %v725, %v924
    %v926 = vpop.f32.mrf.mxu0
    %v927 = vadd.f32 %v730, %v926
    %928 = vmatmul.bf16.gmra.mxu0 %v839
    %v929 = vpop.f32.mrf.mxu0
    %v930 = vadd.f32 %v735, %v929
    %v931 = vpop.f32.mrf.mxu0
    %932 = vdwg.mxu0
    %933 = vmatpush.bf16.msra.mxu0 %v645
    %934 = vmatpush.bf16.msra.mxu0 %v644
    %935 = vmatpush.bf16.msra.mxu0 %v643
    %936 = vmatpush.bf16.msra.mxu0 %v642
    %937 = vmatpush.bf16.msra.mxu0 %v641
    %938 = vmatpush.bf16.msra.mxu0 %v640
    %939 = vmatpush.bf16.msra.mxu0 %v639
    %940 = vmatpush.bf16.msra.mxu0 %v638
    %941 = vmatmul.bf16.gmra.mxu0 %v816
    %v942 = vpop.f32.mrf.mxu0
    %v943 = vadd.f32 %v900, %v942
    %v944 = vpop.f32.mrf.mxu0
    %v945 = vadd.f32 %v902, %v944
    %946 = vmatmul.bf16.gmra.mxu0 %v820
    %v947 = vpop.f32.mrf.mxu0
    %v948 = vadd.f32 %v905, %v947
    %v949 = vpop.f32.mrf.mxu0
    %v950 = vadd.f32 %v907, %v949
    %951 = vmatmul.bf16.gmra.mxu0 %v824
    %v952 = vpop.f32.mrf.mxu0
    %v953 = vadd.f32 %v910, %v952
    %v954 = vpop.f32.mrf.mxu0
    %v955 = vadd.f32 %v912, %v954
    %956 = vmatmul.bf16.gmra.mxu0 %v828
    %v957 = vpop.f32.mrf.mxu0
    %v958 = vadd.f32 %v915, %v957
    %v959 = vpop.f32.mrf.mxu0
    %v960 = vadd.f32 %v917, %v959
    %961 = vmatmul.bf16.gmra.mxu0 %v832
    %v962 = vpop.f32.mrf.mxu0
    %v963 = vadd.f32 %v920, %v962
    %v964 = vpop.f32.mrf.mxu0
    %v965 = vadd.f32 %v922, %v964
    %966 = vmatmul.bf16.gmra.mxu0 %v836
    %v967 = vpop.f32.mrf.mxu0
    %v968 = vadd.f32 %v925, %v967
    %v969 = vpop.f32.mrf.mxu0
    %v970 = vadd.f32 %v927, %v969
    %971 = vmatmul.bf16.gmra.mxu0 %v840
    %v972 = vpop.f32.mrf.mxu0
    %v973 = vadd.f32 %v930, %v972
    %v974 = vpop.f32.mrf.mxu0
    %975 = vdwg.mxu0
    %976 = vmatpush.bf16.msra.mxu0 %v653
    %977 = vmatpush.bf16.msra.mxu0 %v652
    %978 = vmatpush.bf16.msra.mxu0 %v651
    %979 = vmatpush.bf16.msra.mxu0 %v650
    %980 = vmatpush.bf16.msra.mxu0 %v649
    %981 = vmatpush.bf16.msra.mxu0 %v648
    %982 = vmatpush.bf16.msra.mxu0 %v647
    %983 = vmatpush.bf16.msra.mxu0 %v646
    %984 = vmatmul.bf16.gmra.mxu0 %v817
    %v985 = vpop.f32.mrf.mxu0
    %v986 = vadd.f32 %v943, %v985
    %v987 = vpop.f32.mrf.mxu0
    %v988 = vadd.f32 %v945, %v987
    %989 = vmatmul.bf16.gmra.mxu0 %v821
    %v990 = vpop.f32.mrf.mxu0
    %v991 = vadd.f32 %v948, %v990
    %v992 = vpop.f32.mrf.mxu0
    %v993 = vadd.f32 %v950, %v992
    %994 = vmatmul.bf16.gmra.mxu0 %v825
    %v995 = vpop.f32.mrf.mxu0
    %v996 = vadd.f32 %v953, %v995
    %v997 = vpop.f32.mrf.mxu0
    %v998 = vadd.f32 %v955, %v997
    %999 = vmatmul.bf16.gmra.mxu0 %v829
    %v1000 = vpop.f32.mrf.mxu0
    %v1001 = vadd.f32 %v958, %v1000
    %v1002 = vpop.f32.mrf.mxu0
    %v1003 = vadd.f32 %v960, %v1002
    %1004 = vmatmul.bf16.gmra.mxu0 %v833
    %v1005 = vpop.f32.mrf.mxu0
    %v1006 = vadd.f32 %v963, %v1005
    %v1007 = vpop.f32.mrf.mxu0
    %v1008 = vadd.f32 %v965, %v1007
    %1009 = vmatmul.bf16.gmra.mxu0 %v837
    %v1010 = vpop.f32.mrf.mxu0
    %v1011 = vadd.f32 %v968, %v1010
    %v1012 = vpop.f32.mrf.mxu0
    %v1013 = vadd.f32 %v970, %v1012
    %1014 = vmatmul.bf16.gmra.mxu0 %v841
    %v1015 = vpop.f32.mrf.mxu0
    %v1016 = vadd.f32 %v973, %v1015
    %v1017 = vpop.f32.mrf.mxu0
    %1018 = vdwg.mxu0
    %1019 = vmatpush.bf16.msra.mxu0 0
    %1020 = vmatpush.bf16.msra.mxu0 0
    %1021 = vmatpush.bf16.msra.mxu0 0
    %1022 = vmatpush.bf16.msra.mxu0 %v888
    %1023 = vmatpush.bf16.msra.mxu0 %v657
    %1024 = vmatpush.bf16.msra.mxu0 %v656
    %1025 = vmatpush.bf16.msra.mxu0 %v655
    %1026 = vmatpush.bf16.msra.mxu0 %v654
    %1027 = vmatmul.bf16.gmra.mxu0 %v866
    %v1028 = vpop.f32.mrf.mxu0
    %v1029 = vadd.f32 %v986, %v1028
    %v1030 = vpop.f32.mrf.mxu0
    %v1031 = vadd.f32 %v988, %v1030
    %1032 = vmatmul.bf16.gmra.mxu0 %v869
    %v1033 = vpop.f32.mrf.mxu0
    %v1034 = vadd.f32 %v991, %v1033
    %v1035 = vpop.f32.mrf.mxu0
    %v1036 = vadd.f32 %v993, %v1035
    %1037 = vmatmul.bf16.gmra.mxu0 %v872
    %v1038 = vpop.f32.mrf.mxu0
    %v1039 = vadd.f32 %v996, %v1038
    %v1040 = vpop.f32.mrf.mxu0
    %v1041 = vadd.f32 %v998, %v1040
    %1042 = vmatmul.bf16.gmra.mxu0 %v875
    %v1043 = vpop.f32.mrf.mxu0
    %v1044 = vadd.f32 %v1001, %v1043
    %v1045 = vpop.f32.mrf.mxu0
    %v1046 = vadd.f32 %v1003, %v1045
    %1047 = vmatmul.bf16.gmra.mxu0 %v878
    %v1048 = vpop.f32.mrf.mxu0
    %v1049 = vadd.f32 %v1006, %v1048
    %v1050 = vpop.f32.mrf.mxu0
    %v1051 = vadd.f32 %v1008, %v1050
    %1052 = vmatmul.bf16.gmra.mxu0 %v881
    %v1053 = vpop.f32.mrf.mxu0
    %v1054 = vadd.f32 %v1011, %v1053
    %v1055 = vpop.f32.mrf.mxu0
    %v1056 = vadd.f32 %v1013, %v1055
    %1057 = vmatmul.bf16.gmra.mxu0 %v884
    %v1058 = vpop.f32.mrf.mxu0
    %v1059 = vadd.f32 %v1016, %v1058
    %v1060 = vpop.f32.mrf.mxu0
    %1061 = vdwg.mxu0
    %v1062 = vmax.f32 %v1029, 0.0
    %v1063 = vmax.f32 %v1031, 0.0
    %v1064 = vmax.f32 %v1034, 0.0
    %v1065 = vmax.f32 %v1036, 0.0
    %v1066 = vmax.f32 %v1039, 0.0
    %v1067 = vmax.f32 %v1041, 0.0
    %v1068 = vmax.f32 %v1044, 0.0
    %v1069 = vmax.f32 %v1046, 0.0
    %v1070 = vmax.f32 %v1049, 0.0
    %v1071 = vmax.f32 %v1051, 0.0
    %v1072 = vmax.f32 %v1054, 0.0
    %v1073 = vmax.f32 %v1056, 0.0
    %v1074 = vmax.f32 %v1059, 0.0
    %v1075 = vld [vmem:[%s4] sm:$0x1]
    %v1076 = vpack.c.bf16 %v1063, %v1062
    %v1077 = vpack.c.bf16 %v1065, %v1064
    %v1078 = vpack.c.bf16 %v1067, %v1066
    %v1079 = vpack.c.bf16 %v1069, %v1068
    %v1080 = vpack.c.bf16 %v1071, %v1070
    %v1081 = vpack.c.bf16 %v1073, %v1072
    %v1082 = vpack.c.bf16 %v1074, %v1074
    %s1083 = sld [smem:[#allocation2]]
    %v1084 = vstv %s1083
    %vm1085 = vcmask 818176
    %v1087 = vsel %vm1085, %v1075, 0
    %vm1089 = vcmask 1041408
    %v1091 = vsel %vm1089, %v1082, 0
    %1093 = vmatpush.bf16.msra.mxu0 0
    %1094 = vmatpush.bf16.msra.mxu0 %v1091
    %1095 = vmatpush.bf16.msra.mxu0 %v1081
    %1096 = vmatpush.bf16.msra.mxu0 %v1080
    %1097 = vmatpush.bf16.msra.mxu0 %v1079
    %1098 = vmatpush.bf16.msra.mxu0 %v1078
    %1099 = vmatpush.bf16.msra.mxu0 %v1077
    %1100 = vmatpush.bf16.msra.mxu0 %v1076
    %1101 = vmatmul.bf16.gmra.mxu0 %v1087
    %v1102 = vpop.f32.mrf.mxu0
    %v1103 = vadd.f32 %v1084, %v1102
    %v1104 = vpop.f32.mrf.mxu0
    %1105 = vdwg.mxu0
    %1106 = vst [vmem:[#allocation3] sm:$0x1] %v1103
    // Predicated region
    $region26: #{tpu_custom_call.1} parent=1 // pred_check
      _
    $region27: #{tpu_custom_call.1} parent=1 // pred_check_branch
      %1108 = sbr.rel (0) target = $region29
    $region28: #{tpu_custom_call.1} parent=1 // pred_region
      %1110 = vsyncadd [#allocation4], 0
      %s1112 = sshll.u32 [#allocation3], 4
      %s1113 = int_to_ptr.vmem [resolvable:$true] %s1112
      %s1114 = sshll.u32 %s6, 4
      %s1115 = int_to_ptr.hbm [resolvable:$true] %s1114
      %1117 = dma.vmem_to_hbm [thread:$0]  %s1113, 16, %s1115, [#allocation4]
    $region29: #{tpu_custom_call.1} parent=1 // pred_fallthru
      _
    // Predicated region
    $region30: #{tpu_custom_call.1} parent=1 // pred_check
      _
    $region31: #{tpu_custom_call.1} parent=1 // pred_check_branch
      %1119 = sbr.rel (0) target = $region33
    $region32: #{tpu_custom_call.1} parent=1 // pred_region
      %1121 = dma.done [#allocation4], 16
    $region33: #{tpu_custom_call.1} parent=1 // pred_fallthru
      _
    %1122 = vsyncpa [#allocation4], 1

</llo_original>
